<compile_context>
chip_gen: v5e
topology: v5e:2x2
jax: 0.10.0
libtpu: 0.0.40
codegen_flags: <defaults>
</compile_context>

<pallas_src>
import jax
import jax.numpy as jnp
from jax.experimental import pallas as pl
from jax.experimental.pallas import tpu as pltpu

EPS = 1e-6
LANES = 128


def _power_bias_kernel(x_ref, w_ref, bb_ref, o_ref):
    x = x_ref[...].astype(jnp.float32)   # (tm, lanes)
    w = w_ref[...]                       # (1, lanes) f32, broadcasts over rows
    bb = bb_ref[...]                     # (1, lanes) f32, precomputed b**b
    abs_x = jnp.abs(x) + EPS
    # pow lowers to exp(w * log(abs_x)) on the EUP; abs_x > 0 so log is safe.
    out = jnp.power(abs_x, w) - bb
    o_ref[...] = out.astype(o_ref.dtype)


def power_bias_activation(x, weights, biases, *, tile_m=1024):
    """x: [..., size] float array; weights/biases: [size]."""
    size = x.shape[-1]
    assert weights.shape == (size,) and biases.shape == (size,)
    orig_shape = x.shape
    orig_dtype = x.dtype

    x2 = x.reshape(-1, size)
    m = x2.shape[0]

    # Hoist the constant biases**biases out of the kernel (f32 for precision).
    w32 = weights.astype(jnp.float32)
    b32 = biases.astype(jnp.float32)
    bb32 = jnp.power(b32, b32)  # NOTE: NaN for negative biases (matches torch.pow)

    # Fold rows so the lane (last) dim is a multiple of 128 (lane-dense stores).
    pad_rows = 0
    if size % LANES == 0:
        fold, lanes = 1, size
        xf, m_f = x2, m
        w_row, bb_row = w32.reshape(1, lanes), bb32.reshape(1, lanes)
    elif LANES % size == 0:
        fold, lanes = LANES // size, LANES
        pad_rows = (-m) % fold
        if pad_rows:
            pad = jnp.ones((pad_rows, size), dtype=x2.dtype)  # benign pad values
            xf = jnp.concatenate([x2, pad], axis=0)
        else:
            xf = x2
        m_f = (m + pad_rows) // fold
        xf = xf.reshape(m_f, lanes)
        w_row = jnp.tile(w32, fold).reshape(1, lanes)
        bb_row = jnp.tile(bb32, fold).reshape(1, lanes)
    else:
        # TODO(synk): sizes neither dividing nor divisible by 128 stay un-folded
        # (correct, just not lane-dense).
        fold, lanes = 1, size
        xf, m_f = x2, m
        w_row, bb_row = w32.reshape(1, lanes), bb32.reshape(1, lanes)

    # Row tile: either a large multiple-of-8 tile for streaming throughput, or
    # the whole (small) array in one block.
    tm = tile_m if m_f > tile_m else m_f
    grid = (pl.cdiv(m_f, tm),)

    out = pl.pallas_call(
        _power_bias_kernel,
        out_shape=jax.ShapeDtypeStruct((m_f, lanes), orig_dtype),
        grid_spec=pltpu.PrefetchScalarGridSpec(
            num_scalar_prefetch=0,
            grid=grid,
            in_specs=[
                pl.BlockSpec((tm, lanes), lambda i: (i, 0)),
                pl.BlockSpec((1, lanes), lambda i: (0, 0)),
                pl.BlockSpec((1, lanes), lambda i: (0, 0)),
            ],
            out_specs=pl.BlockSpec((tm, lanes), lambda i: (i, 0)),
        ),
        compiler_params=pltpu.CompilerParams(
            dimension_semantics=("parallel",),
            vmem_limit_bytes=32 << 20,  # blocks are <=1 MiB/buf; safe on v5e..v7x
        ),
    )(xf, w_row, bb_row)

    out = out.reshape(-1, size)
    if pad_rows:
        out = out[:m]
    return out.reshape(orig_shape)


def power_bias_activation_ref(x, weights, biases):
    x32 = x.astype(jnp.float32)
    w32 = weights.astype(jnp.float32)
    b32 = biases.astype(jnp.float32)
    abs_x = jnp.abs(x32) + EPS
    return (jnp.power(abs_x, w32) - jnp.power(b32, b32)).astype(x.dtype)


if __name__ == "__main__":
    key = jax.random.PRNGKey(0)
    size = 32

    # Case 1: module-default params (ones), x shape [batch=2, seq=8, hidden=32].
    k1, k2, k3, k4 = jax.random.split(key, 4)
    x = jax.random.normal(k1, (2, 8, size), dtype=jnp.float32)
    weights = jnp.ones((size,), dtype=jnp.float32)
    biases = jnp.ones((size,), dtype=jnp.float32)

    out = jax.block_until_ready(power_bias_activation(x, weights, biases))
    ref = power_bias_activation_ref(x, weights, biases)
    assert out.shape == x.shape
    assert jnp.allclose(out, ref, atol=1e-5, rtol=1e-5), "mismatch (case 1)"

    # Case 2: random positive params, row count not divisible by the fold
    # factor (exercises padding + fold path + the exp/log pow path).
    x2 = jax.random.normal(k2, (3, 7, size), dtype=jnp.float32)
    w2 = 0.5 + jax.random.uniform(k3, (size,), dtype=jnp.float32)
    b2 = 0.5 + jax.random.uniform(k4, (size,), dtype=jnp.float32)

    out2 = jax.block_until_ready(power_bias_activation(x2, w2, b2))
    ref2 = power_bias_activation_ref(x2, w2, b2)
    assert out2.shape == x2.shape
    assert jnp.allclose(out2, ref2, atol=1e-5, rtol=1e-5), "mismatch (case 2)"

    print("KERNEL_OK")
</pallas_src>

<mosaic_0001>
module attributes {stable_mosaic.version = 11 : i64} {
  func.func @_power_bias_kernel(%arg0: i32, %arg1: memref<4x128xf32, #tpu.memory_space<vmem>>, %arg2: memref<1x128xf32, #tpu.memory_space<vmem>>, %arg3: memref<1x128xf32, #tpu.memory_space<vmem>>, %arg4: memref<4x128xf32, #tpu.memory_space<vmem>>) attributes {dimension_semantics = [#tpu.dimension_semantics<parallel>], iteration_bounds = array<i64: 1>, scalar_prefetch = 0 : i64, scratch_operands = 0 : i64, tpu.core_type = #tpu.core_type<tc>, window_params = [{transform_indices = @transform_0, window_bounds = array<i64: 4, 128>}, {pipeline_mode = #tpu.pipeline_mode<synchronous>, transform_indices = @transform_1, window_bounds = array<i64: 1, 128>}, {pipeline_mode = #tpu.pipeline_mode<synchronous>, transform_indices = @transform_2, window_bounds = array<i64: 1, 128>}, {transform_indices = @transform_3, window_bounds = array<i64: 4, 128>}]} {
    %c0 = arith.constant 0 : index
    %c0_0 = arith.constant 0 : index
    %0 = vector.load %arg1[%c0, %c0_0] : memref<4x128xf32, #tpu.memory_space<vmem>>, vector<4x128xf32>
    %c0_1 = arith.constant 0 : index
    %c0_2 = arith.constant 0 : index
    %1 = vector.load %arg2[%c0_1, %c0_2] : memref<1x128xf32, #tpu.memory_space<vmem>>, vector<1x128xf32>
    %c0_3 = arith.constant 0 : index
    %c0_4 = arith.constant 0 : index
    %2 = vector.load %arg3[%c0_3, %c0_4] : memref<1x128xf32, #tpu.memory_space<vmem>>, vector<1x128xf32>
    %3 = math.absf %0 : vector<4x128xf32>
    %cst = arith.constant 9.99999997E-7 : f32
    %4 = vector.broadcast %cst : f32 to vector<4x128xf32>
    %5 = arith.addf %3, %4 : vector<4x128xf32>
    %6 = vector.broadcast %1 : vector<1x128xf32> to vector<4x128xf32>
    %7 = math.powf %5, %6 : vector<4x128xf32>
    %8 = vector.broadcast %2 : vector<1x128xf32> to vector<4x128xf32>
    %9 = arith.subf %7, %8 : vector<4x128xf32>
    %c0_5 = arith.constant 0 : index
    %c0_6 = arith.constant 0 : index
    %10 = vector.load %arg4[%c0_5, %c0_6] : memref<4x128xf32, #tpu.memory_space<vmem>>, vector<4x128xf32>
    tpu.vector_store %arg4[%c0_5, %c0_6], %9 {strides = array<i32>} : memref<4x128xf32, #tpu.memory_space<vmem>>, vector<4x128xf32>,
    return
  }
  func.func @transform_0(%arg0: i32) -> (i32, i32) {
    %c0_i32 = arith.constant 0 : i32
    %c0_i32_0 = arith.constant 0 : i32
    return %arg0, %c0_i32 : i32, i32
  }
  func.func @transform_1(%arg0: i32) -> (i32, i32) {
    %c0_i32 = arith.constant 0 : i32
    %c0_i32_0 = arith.constant 0 : i32
    %c0_i32_1 = arith.constant 0 : i32
    return %c0_i32, %c0_i32_0 : i32, i32
  }
  func.func @transform_2(%arg0: i32) -> (i32, i32) {
    %c0_i32 = arith.constant 0 : i32
    %c0_i32_0 = arith.constant 0 : i32
    %c0_i32_1 = arith.constant 0 : i32
    return %c0_i32, %c0_i32_0 : i32, i32
  }
  func.func @transform_3(%arg0: i32) -> (i32, i32) {
    %c0_i32 = arith.constant 0 : i32
    %c0_i32_0 = arith.constant 0 : i32
    return %arg0, %c0_i32 : i32, i32
  }
}

</mosaic_0001>

<llo_original>
// kernel: tpu_custom_call.1
$region0: #{tpu_custom_call.1}
  #allocation0 [shape = 'u32[]', space=smem, size = 0x4, offset = 0x4, fixed_abs, tag = 'smem constant byte address 0x4 - core index']
  #allocation1 [shape = 'u32[72,128]{1,0:T(1,128)}', space=vmem, size = 0x9000, scoped, tag = 'internal scratch']
  %s0 = inlined_call_operand.hbm [shape: f32[4,128], index: 0, kind: input, shape index: {}]
  %s1 = inlined_call_operand.hbm [shape: f32[1,128], index: 1, kind: input, shape index: {}]
  %s2 = inlined_call_operand.vmem [shape: f32[1,128], index: 2, kind: input, shape index: {}]
  %s3 = inlined_call_operand.hbm [shape: f32[4,128], index: 3, kind: output, shape index: {}]
  %s4 = sld [smem:[#allocation0]]
  $region30: #{tpu_custom_call.1} parent=0
    _
  %s6 = ssub.s32 1, %s4
  %s7 = scalar_select 0, %s6, %s4
  $region1: #{tpu_custom_call.1} parent=0
    #allocation2 [shape = 'u8[2048]{0}', space=vmem, size = 0x800, scoped, tag = 'input window, operand 0, single buffered']
    #allocation3 [shape = 's32[1]{0}', space=sflag, size = 0x4, scoped, tag = 'scoped memory for tpu_custom_call.1']
    #allocation4 [shape = 's32[1]{0}', space=sflag, size = 0x4, scoped, tag = 'scoped memory for tpu_custom_call.1']
    #allocation5 [shape = 'u8[512]{0}', space=vmem, size = 0x400, scoped, tag = 'input window, operand 1, single buffered']
    #allocation6 [shape = 's32[1]{0}', space=sflag, size = 0x4, scoped, tag = 'scoped memory for tpu_custom_call.1']
    #allocation7 [shape = 'u8[2048]{0}', space=vmem, size = 0x800, scoped, tag = 'output window, operand 0, single buffered']
    %8 = vsyncpa [#allocation3], 0
    %9 = vsyncpa [#allocation6], 0
    %10 = vsyncpa [#allocation4], 0
    // Predicated region
    $region2: #{tpu_custom_call.1} parent=1 // pred_check
      _
    $region3: #{tpu_custom_call.1} parent=1 // pred_check_branch
      %12 = sbr.rel (0) target = $region5
    $region4: #{tpu_custom_call.1} parent=1 // pred_region
      %14 = vsyncadd [#allocation3], 0
      %s16 = sshll.u32 %s0, 4
      %s17 = int_to_ptr.hbm [resolvable:$true] %s16
      %s18 = sshll.u32 [#allocation2], 4
      %s19 = int_to_ptr.vmem [resolvable:$true] %s18
      %21 = dma.hbm_to_vmem [thread:$0]  %s17, 64, %s19, [#allocation3]
    $region5: #{tpu_custom_call.1} parent=1 // pred_fallthru
      _
    // Predicated region
    $region6: #{tpu_custom_call.1} parent=1 // pred_check
      _
    $region7: #{tpu_custom_call.1} parent=1 // pred_check_branch
      %23 = sbr.rel (0) target = $region9
    $region8: #{tpu_custom_call.1} parent=1 // pred_region
      %25 = vsyncadd [#allocation6], 0
      %s27 = sshll.u32 %s1, 4
      %s28 = int_to_ptr.hbm [resolvable:$true] %s27
      %s29 = sshll.u32 [#allocation5], 4
      %s30 = int_to_ptr.vmem [resolvable:$true] %s29
      %32 = dma.hbm_to_vmem [thread:$0]  %s28, 16, %s30, [#allocation6]
    $region9: #{tpu_custom_call.1} parent=1 // pred_fallthru
      _
    // Predicated region
    $region10: #{tpu_custom_call.1} parent=1 // pred_check
      _
    $region11: #{tpu_custom_call.1} parent=1 // pred_check_branch
      %34 = sbr.rel (0) target = $region13
    $region12: #{tpu_custom_call.1} parent=1 // pred_region
      _
    $region13: #{tpu_custom_call.1} parent=1 // pred_fallthru
      _
    // Predicated region
    $region14: #{tpu_custom_call.1} parent=1 // pred_check
      _
    $region15: #{tpu_custom_call.1} parent=1 // pred_check_branch
      %36 = sbr.rel (0) target = $region17
    $region16: #{tpu_custom_call.1} parent=1 // pred_region
      %38 = dma.done [#allocation3], 64
    $region17: #{tpu_custom_call.1} parent=1 // pred_fallthru
      _
    // Predicated region
    $region18: #{tpu_custom_call.1} parent=1 // pred_check
      _
    $region19: #{tpu_custom_call.1} parent=1 // pred_check_branch
      %40 = sbr.rel (0) target = $region21
    $region20: #{tpu_custom_call.1} parent=1 // pred_region
      %42 = dma.done [#allocation6], 16
    $region21: #{tpu_custom_call.1} parent=1 // pred_fallthru
      _
    %v43 = vld [vmem:[#allocation2] sm:$0xf]
    %v44 = vld [vmem:[#allocation5] sm:$0x1]
    %v45 = vld [vmem:[%s2] sm:$0x1]
    %v46 = vand.u32 2147483647, %v43
    %v47 = vadd.f32 %v46, 1e-06
    %v49 = vperm.slane %v44, 0
    %v51 = vpow.f32 %v47, %v49
    %v53 = vperm.slane %v45, 0
    %v55 = vsub.f32 %v51, %v53
    %56 = vst [vmem:[#allocation7] sm:$0xf] %v55
    // Predicated region
    $region22: #{tpu_custom_call.1} parent=1 // pred_check
      _
    $region23: #{tpu_custom_call.1} parent=1 // pred_check_branch
      %58 = sbr.rel (0) target = $region25
    $region24: #{tpu_custom_call.1} parent=1 // pred_region
      %60 = vsyncadd [#allocation4], 0
      %s62 = sshll.u32 [#allocation7], 4
      %s63 = int_to_ptr.vmem [resolvable:$true] %s62
      %s64 = sshll.u32 %s3, 4
      %s65 = int_to_ptr.hbm [resolvable:$true] %s64
      %67 = dma.vmem_to_hbm [thread:$0]  %s63, 64, %s65, [#allocation4]
    $region25: #{tpu_custom_call.1} parent=1 // pred_fallthru
      _
    // Predicated region
    $region26: #{tpu_custom_call.1} parent=1 // pred_check
      _
    $region27: #{tpu_custom_call.1} parent=1 // pred_check_branch
      %69 = sbr.rel (0) target = $region29
    $region28: #{tpu_custom_call.1} parent=1 // pred_region
      %71 = dma.done [#allocation4], 64
    $region29: #{tpu_custom_call.1} parent=1 // pred_fallthru
      _
    %72 = vsyncpa [#allocation3], 1
    %73 = vsyncpa [#allocation6], 1
    %74 = vsyncpa [#allocation4], 1

</llo_original>
